<compile_context>
chip_gen: v7x
topology: tpu7x:2x2x1
jax: 0.10.0
libtpu: 0.0.40
codegen_flags: <defaults>
</compile_context>

<pallas_src>
import jax
import jax.numpy as jnp
from jax.experimental import pallas as pl
from jax.experimental.pallas import tpu as pltpu

_LANE = 128
_SUBLANE = 8


# ----------------------------------------------------------------------------
# Deterministic counter-based dropout mask (pure jnp -> portable lowering).
# ----------------------------------------------------------------------------
def _mix_u32(x):
    """lowbias32-style integer finalizer; plenty for dropout masks."""
    x = x ^ (x >> 16)
    x = x * jnp.uint32(0x7FEB352D)
    x = x ^ (x >> 15)
    x = x * jnp.uint32(0x846CA68B)
    x = x ^ (x >> 16)
    return x


def _dropout_keep_mask(shape, row_offset, seed_i32, salt, p):
    """Keep-mask (prob 1-p) for a (rows, cols) tile whose first row is global
    row `row_offset`.  Deterministic in (seed, salt, global element index)."""
    rows = jax.lax.broadcasted_iota(jnp.int32, shape, 0) + row_offset
    cols = jax.lax.broadcasted_iota(jnp.int32, shape, 1)
    # Unique per-element counter, salted per layer and per seed (int32 wraps).
    ctr = rows * shape[1] + cols + (seed_i32 + salt * 7919) * jnp.int32(-1640531527)
    h = _mix_u32(ctr.astype(jnp.uint32))
    # Compare the top 31 hash bits against the threshold (signed-safe compare).
    r = jnp.bitwise_and(h, jnp.uint32(0x7FFFFFFF)).astype(jnp.int32)
    thr = jnp.int32(int(p * float(1 << 31)))
    return r >= thr


def _dropout(x, row_offset, seed_i32, salt, p):
    if p <= 0.0:
        return x
    keep = _dropout_keep_mask(x.shape, row_offset, seed_i32, salt, p)
    return jnp.where(keep, x * jnp.float32(1.0 / (1.0 - p)), jnp.zeros_like(x))


# ----------------------------------------------------------------------------
# Fused Prenet kernel: all layers in one pallas_call, grid over row tiles.
# ----------------------------------------------------------------------------
def _make_prenet_call(n_rows, in_dim_p, sizes, *, tile_rows, p, matmul_dtype,
                      out_dtype):
    n_layers = len(sizes)

    def kernel(seed_ref, x_ref, *w_and_out):
        w_refs = w_and_out[:n_layers]
        o_ref = w_and_out[n_layers]
        seed = seed_ref[0]                              # int32 scalar (SMEM)
        row0 = pl.program_id(0) * tile_rows             # global first row of tile

        h = x_ref[...]                                  # already matmul_dtype
        for layer, w_ref in enumerate(w_refs):
            # one MXU matmul per layer: bf16 operands, f32 accumulation
            acc = jnp.dot(h, w_ref[...], preferred_element_type=jnp.float32)
            acc = jnp.maximum(acc, 0.0)                 # ReLU
            acc = _dropout(acc, row0, seed, layer + 1, p)
            if layer + 1 < n_layers:
                h = acc.astype(matmul_dtype)            # feed next MXU push
            else:
                o_ref[...] = acc.astype(out_dtype)      # lane-dense store

    in_dims = [in_dim_p] + list(sizes[:-1])
    grid = (n_rows // tile_rows,)

    # index_maps receive the scalar-prefetch ref as a trailing positional arg.
    in_specs = [pl.BlockSpec((tile_rows, in_dim_p), lambda i, s: (i, 0))]
    in_specs += [pl.BlockSpec((din, dout), lambda i, s: (0, 0))
                 for din, dout in zip(in_dims, sizes)]
    out_specs = pl.BlockSpec((tile_rows, sizes[-1]), lambda i, s: (i, 0))

    return pl.pallas_call(
        kernel,
        out_shape=jax.ShapeDtypeStruct((n_rows, sizes[-1]), out_dtype),
        grid_spec=pltpu.PrefetchScalarGridSpec(
            num_scalar_prefetch=1,
            grid=grid,
            in_specs=in_specs,
            out_specs=out_specs,
        ),
        compiler_params=pltpu.CompilerParams(
            # row tiles are independent -> megacore / v7x dual-TC friendly
            dimension_semantics=("parallel",),
        ),
    )


def prenet_forward(x, weights, seed, *, p=0.5, tile_rows=256,
                   matmul_dtype=jnp.bfloat16):
    """Prenet forward.  x: (..., in_dim); weights: list of (in_l, out_l) f32."""
    in_dim = x.shape[-1]
    sizes = [int(w.shape[1]) for w in weights]
    lead = x.shape[:-1]

    # Flatten rows; cast to the matmul dtype once on the wrapper side
    # (halves HBM->VMEM traffic vs shipping f32 and casting in-kernel).
    x2 = x.reshape(-1, in_dim).astype(matmul_dtype)
    n = x2.shape[0]

    # Pad the feature axis of the input / first weight to a lane multiple so
    # every load is lane-dense (zero padding -> identical matmul result).
    in_dim_p = max(_LANE, pl.cdiv(in_dim, _LANE) * _LANE)
    if in_dim_p != in_dim:
        x2 = jnp.pad(x2, ((0, 0), (0, in_dim_p - in_dim)))

    w_cast = []
    for layer, w in enumerate(weights):
        wc = w.astype(matmul_dtype)
        if layer == 0 and in_dim_p != in_dim:
            wc = jnp.pad(wc, ((0, in_dim_p - in_dim), (0, 0)))
        w_cast.append(wc)

    # Row tile: multiple of 8 sublanes, capped at tile_rows; pad rows so the
    # grid divides evenly (padded rows are computed and sliced off).
    tile_rows = max(_SUBLANE, pl.cdiv(tile_rows, _SUBLANE) * _SUBLANE)
    tm = max(_SUBLANE, min(tile_rows, pl.cdiv(n, _SUBLANE) * _SUBLANE))
    n_pad = pl.cdiv(n, tm) * tm
    if n_pad != n:
        x2 = jnp.pad(x2, ((0, n_pad - n), (0, 0)))

    call = _make_prenet_call(n_pad, in_dim_p, sizes, tile_rows=tm, p=p,
                             matmul_dtype=matmul_dtype, out_dtype=jnp.float32)
    out = call(jnp.array([seed], jnp.int32), x2, *w_cast)
    return out[:n].reshape(*lead, sizes[-1])


# ----------------------------------------------------------------------------
# Pure-JAX reference (same matmul dtype path, same deterministic dropout mask).
# ----------------------------------------------------------------------------
def prenet_reference(x, weights, seed, *, p=0.5, matmul_dtype=jnp.bfloat16):
    in_dim = x.shape[-1]
    lead = x.shape[:-1]
    h = x.reshape(-1, in_dim).astype(matmul_dtype)
    seed_i32 = jnp.int32(seed)
    n_layers = len(weights)
    out = None
    for layer, w in enumerate(weights):
        acc = jnp.dot(h, w.astype(matmul_dtype),
                      preferred_element_type=jnp.float32)
        acc = jnp.maximum(acc, 0.0)
        acc = _dropout(acc, 0, seed_i32, layer + 1, p)
        if layer + 1 < n_layers:
            h = acc.astype(matmul_dtype)
        else:
            out = acc
    return out.reshape(*lead, weights[-1].shape[1])


# ----------------------------------------------------------------------------
if __name__ == "__main__":
    key = jax.random.PRNGKey(0)

    # Small, Tacotron-2-consistent shapes: in_dim = n_mel_channels (80),
    # prenet sizes [256, 256]; input rows = batch * decoder steps.
    B, T = 2, 64
    in_dim = 80
    sizes = [256, 256]

    k_x, k_w1, k_w2 = jax.random.split(key, 3)

    def xavier(k, din, dout):
        bound = (6.0 / (din + dout)) ** 0.5
        return jax.random.uniform(k, (din, dout), jnp.float32, -bound, bound)

    # LinearNorm(bias=False) weights, stored transposed as (in, out) for x @ W.
    weights = [xavier(k_w1, in_dim, sizes[0]), xavier(k_w2, sizes[0], sizes[1])]

    x = jax.random.normal(k_x, (B, T, in_dim), jnp.float32)
    seed = 1234

    out = prenet_forward(x, weights, seed, tile_rows=64)   # grid = (2,)
    out = jax.block_until_ready(out)
    ref = prenet_reference(x, weights, seed)

    assert out.shape == (B, T, sizes[-1]), out.shape
    assert bool(jnp.all(jnp.isfinite(out)))
    assert bool(jnp.all(out >= 0.0))                       # ReLU + inverted dropout
    zero_frac = float(jnp.mean(out == 0.0))                # ~0.75 (ReLU + p=0.5)
    assert 0.5 <= zero_frac <= 0.95, zero_frac
    assert bool(jnp.allclose(out, ref, rtol=1e-2, atol=1e-2)), \
        float(jnp.max(jnp.abs(out - ref)))

    print("KERNEL_OK")
</pallas_src>

<mosaic_0001>
module attributes {stable_mosaic.version = 11 : i64} {
  func.func @kernel(%arg0: i32, %arg1: memref<1xi32, #tpu.memory_space<smem>>, %arg2: memref<64x128xbf16, #tpu.memory_space<vmem>>, %arg3: memref<128x256xbf16, #tpu.memory_space<vmem>>, %arg4: memref<256x256xbf16, #tpu.memory_space<vmem>>, %arg5: memref<64x256xf32, #tpu.memory_space<vmem>>) attributes {dimension_semantics = [#tpu.dimension_semantics<parallel>], iteration_bounds = array<i64: 2>, scalar_prefetch = 1 : i64, scratch_operands = 0 : i64, tpu.core_type = #tpu.core_type<tc>, window_params = [{transform_indices = @transform_0, window_bounds = array<i64: 64, 128>}, {pipeline_mode = #tpu.pipeline_mode<synchronous>, transform_indices = @transform_1, window_bounds = array<i64: 128, 256>}, {pipeline_mode = #tpu.pipeline_mode<synchronous>, transform_indices = @transform_2, window_bounds = array<i64: 256, 256>}, {transform_indices = @transform_3, window_bounds = array<i64: 64, 256>}]} {
    %c0 = arith.constant 0 : index
    %0 = memref.load %arg1[%c0] : memref<1xi32, #tpu.memory_space<smem>>
    %c64_i32 = arith.constant 64 : i32
    %1 = arith.muli %arg0, %c64_i32 : i32
    %c0_0 = arith.constant 0 : index
    %c0_1 = arith.constant 0 : index
    %2 = vector.load %arg2[%c0_0, %c0_1] : memref<64x128xbf16, #tpu.memory_space<vmem>>, vector<64x128xbf16>
    %c0_2 = arith.constant 0 : index
    %c0_3 = arith.constant 0 : index
    %3 = vector.load %arg3[%c0_2, %c0_3] : memref<128x256xbf16, #tpu.memory_space<vmem>>, vector<128x256xbf16>
    %cst = arith.constant dense<0.000000e+00> : vector<64x256xf32>
    %4 = tpu.matmul %2, %3, %cst {dimension_numbers = #tpu.dot_dimension_numbers<[1], [0], [0], [1], [0, 0, 1, 1], [], []>} : vector<64x128xbf16>, vector<128x256xbf16>, vector<64x256xf32> -> vector<64x256xf32>
    %cst_4 = arith.constant 0.000000e+00 : f32
    %5 = vector.broadcast %cst_4 : f32 to vector<64x256xf32>
    %6 = arith.maximumf %4, %5 : vector<64x256xf32>
    %7 = tpu.iota {dimensions = array<i32: 0>} : vector<64x256xi32>
    %8 = vector.broadcast %1 : i32 to vector<64x256xi32>
    %9 = arith.addi %7, %8 : vector<64x256xi32>
    %10 = tpu.iota {dimensions = array<i32: 1>} : vector<64x256xi32>
    %c256_i32 = arith.constant 256 : i32
    %11 = vector.broadcast %c256_i32 : i32 to vector<64x256xi32>
    %12 = arith.muli %9, %11 : vector<64x256xi32>
    %13 = arith.addi %12, %10 : vector<64x256xi32>
    %c7919_i32 = arith.constant 7919 : i32
    %14 = arith.addi %0, %c7919_i32 : i32
    %c-1640531527_i32 = arith.constant -1640531527 : i32
    %15 = arith.muli %14, %c-1640531527_i32 : i32
    %16 = vector.broadcast %15 : i32 to vector<64x256xi32>
    %17 = arith.addi %13, %16 : vector<64x256xi32>
    %c16_i32 = arith.constant 16 : i32
    %18 = vector.broadcast %c16_i32 : i32 to vector<64x256xi32>
    %19 = arith.shrui %17, %18 : vector<64x256xi32>
    %20 = arith.xori %17, %19 : vector<64x256xi32>
    %c2146121005_i32 = arith.constant 2146121005 : i32
    %21 = vector.broadcast %c2146121005_i32 : i32 to vector<64x256xi32>
    %22 = arith.muli %20, %21 : vector<64x256xi32>
    %c15_i32 = arith.constant 15 : i32
    %23 = vector.broadcast %c15_i32 : i32 to vector<64x256xi32>
    %24 = arith.shrui %22, %23 : vector<64x256xi32>
    %25 = arith.xori %22, %24 : vector<64x256xi32>
    %c-2073254261_i32 = arith.constant -2073254261 : i32
    %26 = vector.broadcast %c-2073254261_i32 : i32 to vector<64x256xi32>
    %27 = arith.muli %25, %26 : vector<64x256xi32>
    %c16_i32_5 = arith.constant 16 : i32
    %28 = vector.broadcast %c16_i32_5 : i32 to vector<64x256xi32>
    %29 = arith.shrui %27, %28 : vector<64x256xi32>
    %30 = arith.xori %27, %29 : vector<64x256xi32>
    %c2147483647_i32 = arith.constant 2147483647 : i32
    %31 = vector.broadcast %c2147483647_i32 : i32 to vector<64x256xi32>
    %32 = arith.andi %30, %31 : vector<64x256xi32>
    %c1073741824_i32 = arith.constant 1073741824 : i32
    %33 = vector.broadcast %c1073741824_i32 : i32 to vector<64x256xi32>
    %34 = arith.cmpi sge, %32, %33 : vector<64x256xi32>
    %cst_6 = arith.constant 2.000000e+00 : f32
    %35 = vector.broadcast %cst_6 : f32 to vector<64x256xf32>
    %36 = arith.mulf %6, %35 : vector<64x256xf32>
    %cst_7 = arith.constant 0.000000e+00 : f32
    %37 = vector.broadcast %cst_7 : f32 to vector<64x256xf32>
    %38 = arith.select %34, %36, %37 : vector<64x256xi1>, vector<64x256xf32>
    %39 = arith.truncf %38 : vector<64x256xf32> to vector<64x256xbf16>
    %c0_8 = arith.constant 0 : index
    %c0_9 = arith.constant 0 : index
    %40 = vector.load %arg4[%c0_8, %c0_9] : memref<256x256xbf16, #tpu.memory_space<vmem>>, vector<256x256xbf16>
    %cst_10 = arith.constant dense<0.000000e+00> : vector<64x256xf32>
    %41 = tpu.matmul %39, %40, %cst_10 {dimension_numbers = #tpu.dot_dimension_numbers<[1], [0], [0], [1], [0, 0, 1, 1], [], []>} : vector<64x256xbf16>, vector<256x256xbf16>, vector<64x256xf32> -> vector<64x256xf32>
    %cst_11 = arith.constant 0.000000e+00 : f32
    %42 = vector.broadcast %cst_11 : f32 to vector<64x256xf32>
    %43 = arith.maximumf %41, %42 : vector<64x256xf32>
    %44 = tpu.iota {dimensions = array<i32: 0>} : vector<64x256xi32>
    %45 = vector.broadcast %1 : i32 to vector<64x256xi32>
    %46 = arith.addi %44, %45 : vector<64x256xi32>
    %47 = tpu.iota {dimensions = array<i32: 1>} : vector<64x256xi32>
    %c256_i32_12 = arith.constant 256 : i32
    %48 = vector.broadcast %c256_i32_12 : i32 to vector<64x256xi32>
    %49 = arith.muli %46, %48 : vector<64x256xi32>
    %50 = arith.addi %49, %47 : vector<64x256xi32>
    %c15838_i32 = arith.constant 15838 : i32
    %51 = arith.addi %0, %c15838_i32 : i32
    %c-1640531527_i32_13 = arith.constant -1640531527 : i32
    %52 = arith.muli %51, %c-1640531527_i32_13 : i32
    %53 = vector.broadcast %52 : i32 to vector<64x256xi32>
    %54 = arith.addi %50, %53 : vector<64x256xi32>
    %c16_i32_14 = arith.constant 16 : i32
    %55 = vector.broadcast %c16_i32_14 : i32 to vector<64x256xi32>
    %56 = arith.shrui %54, %55 : vector<64x256xi32>
    %57 = arith.xori %54, %56 : vector<64x256xi32>
    %c2146121005_i32_15 = arith.constant 2146121005 : i32
    %58 = vector.broadcast %c2146121005_i32_15 : i32 to vector<64x256xi32>
    %59 = arith.muli %57, %58 : vector<64x256xi32>
    %c15_i32_16 = arith.constant 15 : i32
    %60 = vector.broadcast %c15_i32_16 : i32 to vector<64x256xi32>
    %61 = arith.shrui %59, %60 : vector<64x256xi32>
    %62 = arith.xori %59, %61 : vector<64x256xi32>
    %c-2073254261_i32_17 = arith.constant -2073254261 : i32
    %63 = vector.broadcast %c-2073254261_i32_17 : i32 to vector<64x256xi32>
    %64 = arith.muli %62, %63 : vector<64x256xi32>
    %c16_i32_18 = arith.constant 16 : i32
    %65 = vector.broadcast %c16_i32_18 : i32 to vector<64x256xi32>
    %66 = arith.shrui %64, %65 : vector<64x256xi32>
    %67 = arith.xori %64, %66 : vector<64x256xi32>
    %c2147483647_i32_19 = arith.constant 2147483647 : i32
    %68 = vector.broadcast %c2147483647_i32_19 : i32 to vector<64x256xi32>
    %69 = arith.andi %67, %68 : vector<64x256xi32>
    %c1073741824_i32_20 = arith.constant 1073741824 : i32
    %70 = vector.broadcast %c1073741824_i32_20 : i32 to vector<64x256xi32>
    %71 = arith.cmpi sge, %69, %70 : vector<64x256xi32>
    %cst_21 = arith.constant 2.000000e+00 : f32
    %72 = vector.broadcast %cst_21 : f32 to vector<64x256xf32>
    %73 = arith.mulf %43, %72 : vector<64x256xf32>
    %cst_22 = arith.constant 0.000000e+00 : f32
    %74 = vector.broadcast %cst_22 : f32 to vector<64x256xf32>
    %75 = arith.select %71, %73, %74 : vector<64x256xi1>, vector<64x256xf32>
    %c0_23 = arith.constant 0 : index
    %c0_24 = arith.constant 0 : index
    %76 = vector.load %arg5[%c0_23, %c0_24] : memref<64x256xf32, #tpu.memory_space<vmem>>, vector<64x256xf32>
    tpu.vector_store %arg5[%c0_23, %c0_24], %75 {strides = array<i32>} : memref<64x256xf32, #tpu.memory_space<vmem>>, vector<64x256xf32>,
    return
  }
  func.func @transform_0(%arg0: i32, %arg1: memref<1xi32, #tpu.memory_space<smem>>) -> (i32, i32) {
    %c0_i32 = arith.constant 0 : i32
    %c0_i32_0 = arith.constant 0 : i32
    return %arg0, %c0_i32 : i32, i32
  }
  func.func @transform_1(%arg0: i32, %arg1: memref<1xi32, #tpu.memory_space<smem>>) -> (i32, i32) {
    %c0_i32 = arith.constant 0 : i32
    %c0_i32_0 = arith.constant 0 : i32
    %c0_i32_1 = arith.constant 0 : i32
    return %c0_i32, %c0_i32_0 : i32, i32
  }
  func.func @transform_2(%arg0: i32, %arg1: memref<1xi32, #tpu.memory_space<smem>>) -> (i32, i32) {
    %c0_i32 = arith.constant 0 : i32
    %c0_i32_0 = arith.constant 0 : i32
    %c0_i32_1 = arith.constant 0 : i32
    return %c0_i32, %c0_i32_0 : i32, i32
  }
  func.func @transform_3(%arg0: i32, %arg1: memref<1xi32, #tpu.memory_space<smem>>) -> (i32, i32) {
    %c0_i32 = arith.constant 0 : i32
    %c0_i32_0 = arith.constant 0 : i32
    return %arg0, %c0_i32 : i32, i32
  }
}

</mosaic_0001>

<llo_original>
// kernel: tpu_custom_call.1
$region0: #{tpu_custom_call.1}
  #allocation0 [shape = 'u32[]', space=smem, size = 0x4, offset = 0x4, fixed_abs, tag = 'smem constant byte address 0x4 - core index']
  #allocation1 [shape = 'u32[144,128]{1,0:T(1,128)}', space=vmem, size = 0x12000, scoped, tag = 'internal scratch']
  #allocation2 [shape = 's32[1]{0}', space=sflag, size = 0x4, scoped, tag = 'scoped memory for tpu_custom_call.1']
  #allocation3 [shape = 's32[1]{0:T(128)S(6)}', space=smem, size = 0x200, scoped, tag = 'prefetched SMEM operand 0']
  %s0 = inlined_call_operand.<no memory space> [shape: s32[1], index: 0, kind: input, shape index: {}]
  %s1 = inlined_call_operand.hbm [shape: bf16[128,128], index: 1, kind: input, shape index: {}]
  %s2 = inlined_call_operand.hbm [shape: bf16[128,256], index: 2, kind: input, shape index: {}]
  %s3 = inlined_call_operand.hbm [shape: bf16[256,256], index: 3, kind: input, shape index: {}]
  %s4 = inlined_call_operand.hbm [shape: f32[128,256], index: 4, kind: output, shape index: {}]
  %s5 = sld [smem:[#allocation0]]
  $region57: #{tpu_custom_call.1} parent=0
    _
  %s7 = ssub.s32 1, %s5
  %s8 = scalar_select 0, %s7, %s5
  %9 = sst [smem:[#allocation3]] %s0
  $region1: #{tpu_custom_call.1} parent=0
    #allocation4 [shape = 'u8[32768]{0}', space=vmem, size = 0x8000, scoped, tag = 'input window, operand 1']
    #allocation5 [shape = 's32[2]{0}', space=sflag, size = 0x8, scoped, tag = 'scoped memory for tpu_custom_call.1']
    #allocation6 [shape = 's32[2]{0}', space=sflag, size = 0x8, scoped, tag = 'scoped memory for tpu_custom_call.1']
    #allocation7 [shape = 'u8[65536]{0}', space=vmem, size = 0x10000, scoped, tag = 'input window, operand 2, single buffered']
    #allocation8 [shape = 's32[1]{0}', space=sflag, size = 0x4, scoped, tag = 'scoped memory for tpu_custom_call.1']
    #allocation9 [shape = 'u8[131072]{0}', space=vmem, size = 0x20000, scoped, tag = 'input window, operand 3, single buffered']
    #allocation10 [shape = 'u8[131072]{0}', space=vmem, size = 0x20000, scoped, tag = 'output window, operand 0']
    %10 = vsyncpa [#allocation5], 0
    %s11 = scalar_lea.sflag [#allocation5], 1
    %12 = vsyncpa %s11, 0
    %13 = vsyncpa [#allocation8], 0
    %14 = vsyncpa [#allocation6], 0
    %s15 = scalar_lea.sflag [#allocation6], 1
    %16 = vsyncpa %s15, 0
    loop: start=0, step=1, limit=4
    $region2: #{tpu_custom_call.1} parent=1 // loop_pre_header
      _
    $region3: #{tpu_custom_call.1} parent=1 // loop_header
      %s18 = sphi 0, %s22
      %p19 = scmp.ge.s32.totalorder %s18, 4
      %s28 = sphi 0, %s30
      %s31 = sphi 0, %s28
      %s32 = sphi 0, %s31
      %s48 = sphi 0, %s32
      %s52 = sphi 0, %s52
      %s54 = sphi 0, %s52
      %s55 = sphi 0, %s54
      %s69 = sphi 0, %s55
      %s73 = sphi 0, %s73
      %s75 = sphi 0, %s73
      %s76 = sphi 0, %s75
      %s90 = sphi 0, %s76
      %s96 = sphi 0, %s98
      %s99 = sphi 0, %s96
      %s100 = sphi 0, %s99
      %s116 = sphi 0, %s100
    $region4: #{tpu_custom_call.1} parent=1 // loop_header_branch
      %21 = sbr.rel (%p19) target = $region8
    $region5: #{tpu_custom_call.1} parent=1 // loop_body
      %s23 = ssub.s32 %s18, 1
      %s24 = ssub.s32 %s18, 2
      %s25 = sadd.s32 %s18, 1
      %s26 = ssub.s32 %s18, %s25
      %p27 = scmp.eq.s32.totalorder %s26, 0
      %s29 = sadd.s32 %s28, 1
      %s30 = scalar_select %p27, %s28, %s29
      %p33 = pneg %p27
      %p34 = scmp.eq.s32.totalorder %s18, 1
      %p35 = por %p33, %p34
      %p36 = scmp.ne.s32.totalorder %s28, %s31
      %p37 = scmp.eq.s32.totalorder %s18, 0
      %p38 = por %p36, %p37
      %p39 = scmp.ne.s32.totalorder %s28, %s31
      %p40 = scmp.eq.s32.totalorder %s23, 1
      %p41 = por %p39, %p40
      %p42 = scmp.ne.s32.totalorder %s31, %s32
      %p43 = scmp.eq.s32.totalorder %s23, 0
      %p44 = por %p42, %p43
      %p45 = scmp.ne.s32.totalorder %s31, %s32
      %p46 = scmp.eq.s32.totalorder %s24, 1
      %p47 = por %p45, %p46
      %p49 = scmp.ne.s32.totalorder %s32, %s48
      %p50 = scmp.eq.s32.totalorder %s24, 0
      %p51 = por %p49, %p50
      %s53 = sadd.s32 %s52, 1
      %p56 = scmp.eq.s32.totalorder %s18, 1
      %p57 = scmp.ne.s32.totalorder %s52, %s54
      %p58 = scmp.eq.s32.totalorder %s18, 0
      %p59 = por %p57, %p58
      %p60 = scmp.ne.s32.totalorder %s52, %s54
      %p61 = scmp.eq.s32.totalorder %s23, 1
      %p62 = por %p60, %p61
      %p63 = scmp.ne.s32.totalorder %s54, %s55
      %p64 = scmp.eq.s32.totalorder %s23, 0
      %p65 = por %p63, %p64
      %p66 = scmp.ne.s32.totalorder %s54, %s55
      %p67 = scmp.eq.s32.totalorder %s24, 1
      %p68 = por %p66, %p67
      %p70 = scmp.ne.s32.totalorder %s55, %s69
      %p71 = scmp.eq.s32.totalorder %s24, 0
      %p72 = por %p70, %p71
      %s74 = sadd.s32 %s73, 1
      %p77 = scmp.eq.s32.totalorder %s18, 1
      %p78 = scmp.ne.s32.totalorder %s73, %s75
      %p79 = scmp.eq.s32.totalorder %s18, 0
      %p80 = por %p78, %p79
      %p81 = scmp.ne.s32.totalorder %s73, %s75
      %p82 = scmp.eq.s32.totalorder %s23, 1
      %p83 = por %p81, %p82
      %p84 = scmp.ne.s32.totalorder %s75, %s76
      %p85 = scmp.eq.s32.totalorder %s23, 0
      %p86 = por %p84, %p85
      %p87 = scmp.ne.s32.totalorder %s75, %s76
      %p88 = scmp.eq.s32.totalorder %s24, 1
      %p89 = por %p87, %p88
      %p91 = scmp.ne.s32.totalorder %s76, %s90
      %p92 = scmp.eq.s32.totalorder %s24, 0
      %p93 = por %p91, %p92
      %s94 = ssub.s32 %s18, %s25
      %p95 = scmp.eq.s32.totalorder %s94, 0
      %s97 = sadd.s32 %s96, 1
      %s98 = scalar_select %p95, %s96, %s97
      %p101 = pneg %p95
      %p102 = scmp.eq.s32.totalorder %s18, 1
      %p103 = por %p101, %p102
      %p104 = scmp.ne.s32.totalorder %s96, %s99
      %p105 = scmp.eq.s32.totalorder %s18, 0
      %p106 = por %p104, %p105
      %p107 = scmp.ne.s32.totalorder %s96, %s99
      %p108 = scmp.eq.s32.totalorder %s23, 1
      %p109 = por %p107, %p108
      %p110 = scmp.ne.s32.totalorder %s99, %s100
      %p111 = scmp.eq.s32.totalorder %s23, 0
      %p112 = por %p110, %p111
      %p113 = scmp.ne.s32.totalorder %s99, %s100
      %p114 = scmp.eq.s32.totalorder %s24, 1
      %p115 = por %p113, %p114
      %p117 = scmp.ne.s32.totalorder %s100, %s116
      %p118 = scmp.eq.s32.totalorder %s24, 0
      %p119 = por %p117, %p118
      %p120 = scmp.le.s32.totalorder 1, %s18
      %p121 = scmp.lt.s32.totalorder %s18, 3
      %p122 = pnand %p120, %p121
      %p123 = pneg %p122
      // Predicated region
      $region9: #{tpu_custom_call.1} parent=5 // pred_check
        _
      $region10: #{tpu_custom_call.1} parent=5 // pred_check_branch
        %125 = sbr.rel (%p122) target = $region12
      $region11: #{tpu_custom_call.1} parent=5 // pred_region
        %s126 = ssub.s32 %s18, 1
        // Predicated region
        $region13: #{tpu_custom_call.1} parent=11 // pred_check
          %p127 = pneg %p65
        $region14: #{tpu_custom_call.1} parent=11 // pred_check_branch
          %129 = sbr.rel (%p127) target = $region16
        $region15: #{tpu_custom_call.1} parent=11 // pred_region
          %s131 = ssub.s32 2048, 2048
          %132 = vsyncadd [#allocation8], %s131
          %s133 = sshll.u32 [#allocation7], 4
          %s134 = int_to_ptr.vmem [resolvable:$true] %s133
          %139 = dma.hbm_to_vmem [thread:$0]  %s2, 2048, %s134, [#allocation8], 128, 128, 8
        $region16: #{tpu_custom_call.1} parent=11 // pred_fallthru
          _
        // Predicated region
        $region17: #{tpu_custom_call.1} parent=11 // pred_check
          %p140 = pneg %p86
        $region18: #{tpu_custom_call.1} parent=11 // pred_check_branch
          %142 = sbr.rel (%p140) target = $region20
        $region19: #{tpu_custom_call.1} parent=11 // pred_region
          %s144 = ssub.s32 4096, 4096
          %145 = vsyncadd [#allocation8], %s144
          %s146 = sshll.u32 [#allocation9], 4
          %s147 = int_to_ptr.vmem [resolvable:$true] %s146
          %152 = dma.hbm_to_vmem [thread:$0]  %s3, 4096, %s147, [#allocation8], 128, 128, 8
        $region20: #{tpu_custom_call.1} parent=11 // pred_fallthru
          _
      $region12: #{tpu_custom_call.1} parent=5 // pred_fallthru
        _
      %p153 = scmp.lt.s32.totalorder %s18, 2
      // Predicated region
      $region21: #{tpu_custom_call.1} parent=5 // pred_check
        %p154 = pneg %p153
      $region22: #{tpu_custom_call.1} parent=5 // pred_check_branch
        %156 = sbr.rel (%p154) target = $region24
      $region23: #{tpu_custom_call.1} parent=5 // pred_region
        // Predicated region
        $region25: #{tpu_custom_call.1} parent=23 // pred_check
          %p157 = pneg %p38
        $region26: #{tpu_custom_call.1} parent=23 // pred_check_branch
          %159 = sbr.rel (%p157) target = $region28
        $region27: #{tpu_custom_call.1} parent=23 // pred_region
          %s160 = sand.u32 %s28, 1
          %s161 = scalar_lea.sflag [#allocation5], %s160
          %s162 = sand.u32 %s28, 1
          %s163 = smul.addr %s162, 32
          %s164 = scalar_lea.vmem [#allocation4], %s163
          %s165 = smul.u32 8, %s18
          %s167 = ssub.s32 512, 512
          %168 = vsyncadd %s161, %s167
          %s169 = smul.addr %s165, 64
          %s170 = scalar_lea.hbm %s1, %s169
          %s171 = sshll.u32 %s164, 4
          %s172 = int_to_ptr.vmem [resolvable:$true] %s171
          %177 = dma.hbm_to_vmem [thread:$0]  %s170, 512, %s172, %s161, 64, 64, 4
        $region28: #{tpu_custom_call.1} parent=23 // pred_fallthru
          _
      $region24: #{tpu_custom_call.1} parent=5 // pred_fallthru
        _
      %p178 = scmp.le.s32.totalorder 1, %s18
      %p179 = scmp.lt.s32.totalorder %s18, 3
      %p180 = pnand %p178, %p179
      %p181 = pneg %p180
      // Predicated region
      $region29: #{tpu_custom_call.1} parent=5 // pred_check
        _
      $region30: #{tpu_custom_call.1} parent=5 // pred_check_branch
        %183 = sbr.rel (%p180) target = $region32
      $region31: #{tpu_custom_call.1} parent=5 // pred_region
        %s184 = ssub.s32 %s18, 1
        %s185 = sand.u32 %s31, 1
        %s186 = scalar_lea.sflag [#allocation5], %s185
        %s187 = sand.u32 %s31, 1
        %s188 = smul.addr %s187, 32
        %s189 = scalar_lea.vmem [#allocation4], %s188
        // Predicated region
        $region33: #{tpu_custom_call.1} parent=31 // pred_check
          %p190 = pneg %p44
        $region34: #{tpu_custom_call.1} parent=31 // pred_check_branch
          %192 = sbr.rel (%p190) target = $region36
        $region35: #{tpu_custom_call.1} parent=31 // pred_region
          %193 = dma.done %s186, 512
        $region36: #{tpu_custom_call.1} parent=31 // pred_fallthru
          _
        // Predicated region
        $region37: #{tpu_custom_call.1} parent=31 // pred_check
          %p194 = pneg %p65
        $region38: #{tpu_custom_call.1} parent=31 // pred_check_branch
          %196 = sbr.rel (%p194) target = $region40
        $region39: #{tpu_custom_call.1} parent=31 // pred_region
          %197 = dma.done [#allocation8], 2048
        $region40: #{tpu_custom_call.1} parent=31 // pred_fallthru
          _
        // Predicated region
        $region41: #{tpu_custom_call.1} parent=31 // pred_check
          %p198 = pneg %p86
        $region42: #{tpu_custom_call.1} parent=31 // pred_check_branch
          %200 = sbr.rel (%p198) target = $region44
        $region43: #{tpu_custom_call.1} parent=31 // pred_region
          %201 = dma.done [#allocation8], 4096
        $region44: #{tpu_custom_call.1} parent=31 // pred_fallthru
          _
        %s202 = sand.u32 %s31, 1
        %s203 = scalar_lea.sflag [#allocation5], %s202
        %s204 = sand.u32 %s31, 1
        %s205 = smul.addr %s204, 32
        %s206 = scalar_lea.vmem [#allocation4], %s205
        %p207 = pneg %p44
        %p208 = pneg %p41
        %p209 = pneg %p65
        %p210 = pneg %p62
        %p211 = pneg %p86
        %p212 = pneg %p83
        %p213 = pneg %p112
        %p214 = pneg %p109
        %s215 = sand.u32 %s99, 1
        %s216 = scalar_lea.sflag [#allocation6], %s215
        %s217 = sand.u32 %s99, 1
        %s218 = smul.addr %s217, 128
        %s219 = scalar_lea.vmem [#allocation10], %s218
        %s220 = smul.u32 8, %s23
        %s221 = smul.u32 8, %s23
        %s223 = sld [smem:[#allocation3]]
        %s224 = smul.u32 %s23, 64
        %v225 = vld [vmem:[%s189] sm:$0xf]
        %v226 = vld [vmem:[%s189 + $0x4] sm:$0xf]
        %v227 = vld [vmem:[%s189 + $0x8] sm:$0xf]
        %v228 = vld [vmem:[%s189 + $0xc] sm:$0xf]
        %v229 = vld [vmem:[%s189 + $0x10] sm:$0xf]
        %v230 = vld [vmem:[%s189 + $0x14] sm:$0xf]
        %v231 = vld [vmem:[%s189 + $0x18] sm:$0xf]
        %v232 = vld [vmem:[%s189 + $0x1c] sm:$0xf]
        %v233 = vld [vmem:[#allocation7] sm:$0xff]
        %v234 = vld [vmem:[#allocation7 + $0x8] sm:$0xff]
        %v235 = vld [vmem:[#allocation7 + $0x10] sm:$0xff]
        %v236 = vld [vmem:[#allocation7 + $0x18] sm:$0xff]
        %v237 = vld [vmem:[#allocation7 + $0x20] sm:$0xff]
        %v238 = vld [vmem:[#allocation7 + $0x28] sm:$0xff]
        %v239 = vld [vmem:[#allocation7 + $0x30] sm:$0xff]
        %v240 = vld [vmem:[#allocation7 + $0x38] sm:$0xff]
        %v241 = vld [vmem:[#allocation7 + $0x40] sm:$0xff]
        %v242 = vld [vmem:[#allocation7 + $0x48] sm:$0xff]
        %v243 = vld [vmem:[#allocation7 + $0x50] sm:$0xff]
        %v244 = vld [vmem:[#allocation7 + $0x58] sm:$0xff]
        %v245 = vld [vmem:[#allocation7 + $0x60] sm:$0xff]
        %v246 = vld [vmem:[#allocation7 + $0x68] sm:$0xff]
        %v247 = vld [vmem:[#allocation7 + $0x70] sm:$0xff]
        %v248 = vld [vmem:[#allocation7 + $0x78] sm:$0xff]
        %v257 = vunpack.c.l.b16 %v225
        %v258 = vunpack.c.l.b16 %v226
        %v259 = vunpack.c.l.b16 %v227
        %v260 = vunpack.c.l.b16 %v228
        %v261 = vunpack.c.l.b16 %v229
        %v262 = vunpack.c.l.b16 %v230
        %v263 = vunpack.c.l.b16 %v231
        %v264 = vunpack.c.l.b16 %v232
        %v265 = vpack.c.b16 %v258, %v257
        %v266 = vpack.c.b16 %v260, %v259
        %v267 = vpack.c.b16 %v262, %v261
        %v268 = vpack.c.b16 %v264, %v263
        %v289 = vunpack.c.l.b16 %v233
        %v290 = vunpack.c.h.b16 %v233
        %v291 = vunpack.c.l.b16 %v234
        %v292 = vunpack.c.h.b16 %v234
        %v293 = vunpack.c.l.b16 %v235
        %v294 = vunpack.c.h.b16 %v235
        %v295 = vunpack.c.l.b16 %v236
        %v296 = vunpack.c.h.b16 %v236
        %v297 = vunpack.c.l.b16 %v237
        %v298 = vunpack.c.h.b16 %v237
        %v299 = vunpack.c.l.b16 %v238
        %v300 = vunpack.c.h.b16 %v238
        %v301 = vunpack.c.l.b16 %v239
        %v302 = vunpack.c.h.b16 %v239
        %v303 = vunpack.c.l.b16 %v240
        %v304 = vunpack.c.h.b16 %v240
        %v305 = vunpack.c.l.b16 %v241
        %v306 = vunpack.c.h.b16 %v241
        %v307 = vunpack.c.l.b16 %v242
        %v308 = vunpack.c.h.b16 %v242
        %v309 = vunpack.c.l.b16 %v243
        %v310 = vunpack.c.h.b16 %v243
        %v311 = vunpack.c.l.b16 %v244
        %v312 = vunpack.c.h.b16 %v244
        %v313 = vunpack.c.l.b16 %v245
        %v314 = vunpack.c.h.b16 %v245
        %v315 = vunpack.c.l.b16 %v246
        %v316 = vunpack.c.h.b16 %v246
        %v317 = vunpack.c.l.b16 %v247
        %v318 = vunpack.c.h.b16 %v247
        %v319 = vunpack.c.l.b16 %v248
        %v320 = vunpack.c.h.b16 %v248
        %v321 = vpack.c.b16 %v291, %v289
        %v322 = vpack.c.b16 %v292, %v290
        %v323 = vpack.c.b16 %v295, %v293
        %v324 = vpack.c.b16 %v296, %v294
        %v325 = vpack.c.b16 %v299, %v297
        %v326 = vpack.c.b16 %v300, %v298
        %v327 = vpack.c.b16 %v303, %v301
        %v328 = vpack.c.b16 %v304, %v302
        %v329 = vpack.c.b16 %v307, %v305
        %v330 = vpack.c.b16 %v308, %v306
        %v331 = vpack.c.b16 %v311, %v309
        %v332 = vpack.c.b16 %v312, %v310
        %v333 = vpack.c.b16 %v315, %v313
        %v334 = vpack.c.b16 %v316, %v314
        %v335 = vpack.c.b16 %v319, %v317
        %v336 = vpack.c.b16 %v320, %v318
        %353 = vmatprep.subr.bf16.mxu0 %v322
        %354 = vmatpush1.bf16.msra.mxu0 %v321
        %355 = vmatprep.subr.bf16.mxu0 %v324
        %356 = vmatpush1.bf16.msra.mxu0 %v323
        %357 = vmatprep.subr.bf16.mxu0 %v326
        %358 = vmatpush1.bf16.msra.mxu0 %v325
        %359 = vmatprep.subr.bf16.mxu0 %v328
        %360 = vmatpush1.bf16.msra.mxu0 %v327
        %361 = vmatprep.subr.bf16.mxu0 %v330
        %362 = vmatpush1.bf16.msra.mxu0 %v329
        %363 = vmatprep.subr.bf16.mxu0 %v332
        %364 = vmatpush1.bf16.msra.mxu0 %v331
        %365 = vmatprep.subr.bf16.mxu0 %v334
        %366 = vmatpush1.bf16.msra.mxu0 %v333
        %367 = vmatprep.subr.bf16.mxu0 %v336
        %368 = vmatpush1.bf16.msra.mxu0 %v335
        %369 = vmatprep.subr.bf16.mxu0 0
        %370 = vmatpush1.bf16.msra.mxu0 0
        %371 = vmatprep.subr.bf16.mxu0 0
        %372 = vmatpush1.bf16.msra.mxu0 0
        %373 = vmatprep.subr.bf16.mxu0 0
        %374 = vmatpush1.bf16.msra.mxu0 0
        %375 = vmatprep.subr.bf16.mxu0 0
        %376 = vmatpush1.bf16.msra.mxu0 0
        %377 = vmatprep.subr.bf16.mxu0 0
        %378 = vmatpush1.bf16.msra.mxu0 0
        %379 = vmatprep.subr.bf16.mxu0 0
        %380 = vmatpush1.bf16.msra.mxu0 0
        %381 = vmatprep.subr.bf16.mxu0 0
        %382 = vmatpush1.bf16.msra.mxu0 0
        %383 = vmatprep.subr.bf16.mxu0 0
        %384 = vmatpush1.bf16.msra.mxu0 0
        %385 = vmatprep.mubr.bf16.mxu0 0
        %386 = vmatmul.mubr.bf16.gmra.mrb[0].mxu0 %v265
        %v387 = vpop.f32.mrb[0].mxu0
        %v388 = vadd.f32 0.0, %v387
        %v389 = vpop.f32.mrb[0].mxu0
        %v390 = vadd.f32 0.0, %v389
        %v391 = vpop.f32.mrb[0].mxu0
        %v392 = vadd.f32 0.0, %v391
        %v393 = vpop.f32.mrb[0].mxu0
        %v394 = vadd.f32 0.0, %v393
        %395 = vmatprep.mubr.bf16.mxu0 0
        %396 = vmatmul.mubr.bf16.gmra.mrb[0].mxu0 %v266
        %v397 = vpop.f32.mrb[0].mxu0
        %v398 = vadd.f32 0.0, %v397
        %v399 = vpop.f32.mrb[0].mxu0
        %v400 = vadd.f32 0.0, %v399
        %v401 = vpop.f32.mrb[0].mxu0
        %v402 = vadd.f32 0.0, %v401
        %v403 = vpop.f32.mrb[0].mxu0
        %v404 = vadd.f32 0.0, %v403
        %405 = vmatprep.mubr.bf16.mxu0 0
        %406 = vmatmul.mubr.bf16.gmra.mrb[0].mxu0 %v267
        %v407 = vpop.f32.mrb[0].mxu0
        %v408 = vadd.f32 0.0, %v407
        %v409 = vpop.f32.mrb[0].mxu0
        %v410 = vadd.f32 0.0, %v409
        %v411 = vpop.f32.mrb[0].mxu0
        %v412 = vadd.f32 0.0, %v411
        %v413 = vpop.f32.mrb[0].mxu0
        %v414 = vadd.f32 0.0, %v413
        %415 = vmatprep.mubr.bf16.mxu0 0
        %416 = vmatmul.mubr.bf16.gmra.mrb[0].mxu0 %v268
        %v417 = vpop.f32.mrb[0].mxu0
        %v418 = vadd.f32 0.0, %v417
        %v419 = vpop.f32.mrb[0].mxu0
        %v420 = vadd.f32 0.0, %v419
        %v421 = vpop.f32.mrb[0].mxu0
        %v422 = vadd.f32 0.0, %v421
        %v423 = vpop.f32.mrb[0].mxu0
        %v424 = vadd.f32 0.0, %v423
        %425 = vdwg.mxu0
        %v426 = vmax.f32 %v388, 0.0
        %v427 = vmax.f32 %v390, 0.0
        %v428 = vmax.f32 %v392, 0.0
        %v429 = vmax.f32 %v394, 0.0
        %v430 = vmax.f32 %v398, 0.0
        %v431 = vmax.f32 %v400, 0.0
        %v432 = vmax.f32 %v402, 0.0
        %v433 = vmax.f32 %v404, 0.0
        %v434 = vmax.f32 %v408, 0.0
        %v435 = vmax.f32 %v410, 0.0
        %v436 = vmax.f32 %v412, 0.0
        %v437 = vmax.f32 %v414, 0.0
        %v438 = vmax.f32 %v418, 0.0
        %v439 = vmax.f32 %v420, 0.0
        %v440 = vmax.f32 %v422, 0.0
        %v441 = vmax.f32 %v424, 0.0
        %v442 = vlaneseq
        %v443 = vshrl.u32 %v442, 7
        %v444 = vadd.s32 %v443, 8
        %v445 = vadd.s32 %v443, 16
        %v446 = vadd.s32 %v443, 24
        %v447 = vadd.s32 %v443, 32
        %v448 = vadd.s32 %v443, 40
        %v449 = vadd.s32 %v443, 48
        %v450 = vadd.s32 %v443, 56
        %v451 = vstv %s224
        %v452 = vadd.s32 %v443, %v451
        %v453 = vadd.s32 %v444, %v451
        %v454 = vadd.s32 %v445, %v451
        %v455 = vadd.s32 %v446, %v451
        %v456 = vadd.s32 %v447, %v451
        %v457 = vadd.s32 %v448, %v451
        %v458 = vadd.s32 %v449, %v451
        %v459 = vadd.s32 %v450, %v451
        %v460 = vlaneseq
        %v461 = vand.u32 %v460, 127
        %v462 = vadd.s32 %v461, 128
        %v463 = vmul.u32 %v452, 256
        %v464 = vmul.u32 %v453, 256
        %v465 = vmul.u32 %v454, 256
        %v466 = vmul.u32 %v455, 256
        %v467 = vmul.u32 %v456, 256
        %v468 = vmul.u32 %v457, 256
        %v469 = vmul.u32 %v458, 256
        %v470 = vmul.u32 %v459, 256
        %v471 = vadd.s32 %v463, %v461
        %v472 = vadd.s32 %v463, %v462
        %v473 = vadd.s32 %v464, %v461
        %v474 = vadd.s32 %v464, %v462
        %v475 = vadd.s32 %v465, %v461
        %v476 = vadd.s32 %v465, %v462
        %v477 = vadd.s32 %v466, %v461
        %v478 = vadd.s32 %v466, %v462
        %v479 = vadd.s32 %v467, %v461
        %v480 = vadd.s32 %v467, %v462
        %v481 = vadd.s32 %v468, %v461
        %v482 = vadd.s32 %v468, %v462
        %v483 = vadd.s32 %v469, %v461
        %v484 = vadd.s32 %v469, %v462
        %v485 = vadd.s32 %v470, %v461
        %v486 = vadd.s32 %v470, %v462
        %s487 = sadd.s32 %s223, 7919
        %s488 = smul.u32 %s487, 2654435769
        %v489 = vstv %s488
        %v490 = vadd.s32 %v471, %v489
        %v491 = vadd.s32 %v472, %v489
        %v492 = vadd.s32 %v473, %v489
        %v493 = vadd.s32 %v474, %v489
        %v494 = vadd.s32 %v475, %v489
        %v495 = vadd.s32 %v476, %v489
        %v496 = vadd.s32 %v477, %v489
        %v497 = vadd.s32 %v478, %v489
        %v498 = vadd.s32 %v479, %v489
        %v499 = vadd.s32 %v480, %v489
        %v500 = vadd.s32 %v481, %v489
        %v501 = vadd.s32 %v482, %v489
        %v502 = vadd.s32 %v483, %v489
        %v503 = vadd.s32 %v484, %v489
        %v504 = vadd.s32 %v485, %v489
        %v505 = vadd.s32 %v486, %v489
        %v506 = vshrl.u32 %v490, 16
        %v507 = vshrl.u32 %v491, 16
        %v508 = vshrl.u32 %v492, 16
        %v509 = vshrl.u32 %v493, 16
        %v510 = vshrl.u32 %v494, 16
        %v511 = vshrl.u32 %v495, 16
        %v512 = vshrl.u32 %v496, 16
        %v513 = vshrl.u32 %v497, 16
        %v514 = vshrl.u32 %v498, 16
        %v515 = vshrl.u32 %v499, 16
        %v516 = vshrl.u32 %v500, 16
        %v517 = vshrl.u32 %v501, 16
        %v518 = vshrl.u32 %v502, 16
        %v519 = vshrl.u32 %v503, 16
        %v520 = vshrl.u32 %v504, 16
        %v521 = vshrl.u32 %v505, 16
        %v522 = vxor.u32 %v490, %v506
        %v523 = vxor.u32 %v491, %v507
        %v524 = vxor.u32 %v492, %v508
        %v525 = vxor.u32 %v493, %v509
        %v526 = vxor.u32 %v494, %v510
        %v527 = vxor.u32 %v495, %v511
        %v528 = vxor.u32 %v496, %v512
        %v529 = vxor.u32 %v497, %v513
        %v530 = vxor.u32 %v498, %v514
        %v531 = vxor.u32 %v499, %v515
        %v532 = vxor.u32 %v500, %v516
        %v533 = vxor.u32 %v501, %v517
        %v534 = vxor.u32 %v502, %v518
        %v535 = vxor.u32 %v503, %v519
        %v536 = vxor.u32 %v504, %v520
        %v537 = vxor.u32 %v505, %v521
        %v538 = vmul.u32 %v522, 2146121005
        %v539 = vmul.u32 %v523, 2146121005
        %v540 = vmul.u32 %v524, 2146121005
        %v541 = vmul.u32 %v525, 2146121005
        %v542 = vmul.u32 %v526, 2146121005
        %v543 = vmul.u32 %v527, 2146121005
        %v544 = vmul.u32 %v528, 2146121005
        %v545 = vmul.u32 %v529, 2146121005
        %v546 = vmul.u32 %v530, 2146121005
        %v547 = vmul.u32 %v531, 2146121005
        %v548 = vmul.u32 %v532, 2146121005
        %v549 = vmul.u32 %v533, 2146121005
        %v550 = vmul.u32 %v534, 2146121005
        %v551 = vmul.u32 %v535, 2146121005
        %v552 = vmul.u32 %v536, 2146121005
        %v553 = vmul.u32 %v537, 2146121005
        %v554 = vshrl.u32 %v538, 15
        %v555 = vshrl.u32 %v539, 15
        %v556 = vshrl.u32 %v540, 15
        %v557 = vshrl.u32 %v541, 15
        %v558 = vshrl.u32 %v542, 15
        %v559 = vshrl.u32 %v543, 15
        %v560 = vshrl.u32 %v544, 15
        %v561 = vshrl.u32 %v545, 15
        %v562 = vshrl.u32 %v546, 15
        %v563 = vshrl.u32 %v547, 15
        %v564 = vshrl.u32 %v548, 15
        %v565 = vshrl.u32 %v549, 15
        %v566 = vshrl.u32 %v550, 15
        %v567 = vshrl.u32 %v551, 15
        %v568 = vshrl.u32 %v552, 15
        %v569 = vshrl.u32 %v553, 15
        %v570 = vxor.u32 %v538, %v554
        %v571 = vxor.u32 %v539, %v555
        %v572 = vxor.u32 %v540, %v556
        %v573 = vxor.u32 %v541, %v557
        %v574 = vxor.u32 %v542, %v558
        %v575 = vxor.u32 %v543, %v559
        %v576 = vxor.u32 %v544, %v560
        %v577 = vxor.u32 %v545, %v561
        %v578 = vxor.u32 %v546, %v562
        %v579 = vxor.u32 %v547, %v563
        %v580 = vxor.u32 %v548, %v564
        %v581 = vxor.u32 %v549, %v565
        %v582 = vxor.u32 %v550, %v566
        %v583 = vxor.u32 %v551, %v567
        %v584 = vxor.u32 %v552, %v568
        %v585 = vxor.u32 %v553, %v569
        %v586 = vmul.u32 %v570, 2221713035
        %v587 = vmul.u32 %v571, 2221713035
        %v588 = vmul.u32 %v572, 2221713035
        %v589 = vmul.u32 %v573, 2221713035
        %v590 = vmul.u32 %v574, 2221713035
        %v591 = vmul.u32 %v575, 2221713035
        %v592 = vmul.u32 %v576, 2221713035
        %v593 = vmul.u32 %v577, 2221713035
        %v594 = vmul.u32 %v578, 2221713035
        %v595 = vmul.u32 %v579, 2221713035
        %v596 = vmul.u32 %v580, 2221713035
        %v597 = vmul.u32 %v581, 2221713035
        %v598 = vmul.u32 %v582, 2221713035
        %v599 = vmul.u32 %v583, 2221713035
        %v600 = vmul.u32 %v584, 2221713035
        %v601 = vmul.u32 %v585, 2221713035
        %v602 = vshrl.u32 %v586, 16
        %v603 = vshrl.u32 %v587, 16
        %v604 = vshrl.u32 %v588, 16
        %v605 = vshrl.u32 %v589, 16
        %v606 = vshrl.u32 %v590, 16
        %v607 = vshrl.u32 %v591, 16
        %v608 = vshrl.u32 %v592, 16
        %v609 = vshrl.u32 %v593, 16
        %v610 = vshrl.u32 %v594, 16
        %v611 = vshrl.u32 %v595, 16
        %v612 = vshrl.u32 %v596, 16
        %v613 = vshrl.u32 %v597, 16
        %v614 = vshrl.u32 %v598, 16
        %v615 = vshrl.u32 %v599, 16
        %v616 = vshrl.u32 %v600, 16
        %v617 = vshrl.u32 %v601, 16
        %v618 = vxor.u32 %v586, %v602
        %v619 = vxor.u32 %v587, %v603
        %v620 = vxor.u32 %v588, %v604
        %v621 = vxor.u32 %v589, %v605
        %v622 = vxor.u32 %v590, %v606
        %v623 = vxor.u32 %v591, %v607
        %v624 = vxor.u32 %v592, %v608
        %v625 = vxor.u32 %v593, %v609
        %v626 = vxor.u32 %v594, %v610
        %v627 = vxor.u32 %v595, %v611
        %v628 = vxor.u32 %v596, %v612
        %v629 = vxor.u32 %v597, %v613
        %v630 = vxor.u32 %v598, %v614
        %v631 = vxor.u32 %v599, %v615
        %v632 = vxor.u32 %v600, %v616
        %v633 = vxor.u32 %v601, %v617
        %v634 = vand.u32 %v618, 2147483647
        %v635 = vand.u32 %v619, 2147483647
        %v636 = vand.u32 %v620, 2147483647
        %v637 = vand.u32 %v621, 2147483647
        %v638 = vand.u32 %v622, 2147483647
        %v639 = vand.u32 %v623, 2147483647
        %v640 = vand.u32 %v624, 2147483647
        %v641 = vand.u32 %v625, 2147483647
        %v642 = vand.u32 %v626, 2147483647
        %v643 = vand.u32 %v627, 2147483647
        %v644 = vand.u32 %v628, 2147483647
        %v645 = vand.u32 %v629, 2147483647
        %v646 = vand.u32 %v630, 2147483647
        %v647 = vand.u32 %v631, 2147483647
        %v648 = vand.u32 %v632, 2147483647
        %v649 = vand.u32 %v633, 2147483647
        %vm650 = vcmp.ge.s32.totalorder %v634, 1073741824
        %vm651 = vcmp.ge.s32.totalorder %v635, 1073741824
        %vm652 = vcmp.ge.s32.totalorder %v636, 1073741824
        %vm653 = vcmp.ge.s32.totalorder %v637, 1073741824
        %vm654 = vcmp.ge.s32.totalorder %v638, 1073741824
        %vm655 = vcmp.ge.s32.totalorder %v639, 1073741824
        %vm656 = vcmp.ge.s32.totalorder %v640, 1073741824
        %vm657 = vcmp.ge.s32.totalorder %v641, 1073741824
        %vm658 = vcmp.ge.s32.totalorder %v642, 1073741824
        %vm659 = vcmp.ge.s32.totalorder %v643, 1073741824
        %vm660 = vcmp.ge.s32.totalorder %v644, 1073741824
        %vm661 = vcmp.ge.s32.totalorder %v645, 1073741824
        %vm662 = vcmp.ge.s32.totalorder %v646, 1073741824
        %vm663 = vcmp.ge.s32.totalorder %v647, 1073741824
        %vm664 = vcmp.ge.s32.totalorder %v648, 1073741824
        %vm665 = vcmp.ge.s32.totalorder %v649, 1073741824
        %v666 = vmul.f32 %v426, 2.0
        %v667 = vmul.f32 %v427, 2.0
        %v668 = vmul.f32 %v428, 2.0
        %v669 = vmul.f32 %v429, 2.0
        %v670 = vmul.f32 %v430, 2.0
        %v671 = vmul.f32 %v431, 2.0
        %v672 = vmul.f32 %v432, 2.0
        %v673 = vmul.f32 %v433, 2.0
        %v674 = vmul.f32 %v434, 2.0
        %v675 = vmul.f32 %v435, 2.0
        %v676 = vmul.f32 %v436, 2.0
        %v677 = vmul.f32 %v437, 2.0
        %v678 = vmul.f32 %v438, 2.0
        %v679 = vmul.f32 %v439, 2.0
        %v680 = vmul.f32 %v440, 2.0
        %v681 = vmul.f32 %v441, 2.0
        %v682 = vsel %vm650, %v666, 0.0
        %v683 = vsel %vm651, %v667, 0.0
        %v684 = vsel %vm652, %v668, 0.0
        %v685 = vsel %vm653, %v669, 0.0
        %v686 = vsel %vm654, %v670, 0.0
        %v687 = vsel %vm655, %v671, 0.0
        %v688 = vsel %vm656, %v672, 0.0
        %v689 = vsel %vm657, %v673, 0.0
        %v690 = vsel %vm658, %v674, 0.0
        %v691 = vsel %vm659, %v675, 0.0
        %v692 = vsel %vm660, %v676, 0.0
        %v693 = vsel %vm661, %v677, 0.0
        %v694 = vsel %vm662, %v678, 0.0
        %v695 = vsel %vm663, %v679, 0.0
        %v696 = vsel %vm664, %v680, 0.0
        %v697 = vsel %vm665, %v681, 0.0
        %v698 = vpack.c.bf16 %v684, %v682
        %v699 = vpack.c.bf16 %v685, %v683
        %v700 = vpack.c.bf16 %v688, %v686
        %v701 = vpack.c.bf16 %v689, %v687
        %v702 = vpack.c.bf16 %v692, %v690
        %v703 = vpack.c.bf16 %v693, %v691
        %v704 = vpack.c.bf16 %v696, %v694
        %v705 = vpack.c.bf16 %v697, %v695
        %v706 = vld [vmem:[#allocation9] sm:$0xff]
        %v707 = vld [vmem:[#allocation9 + $0x8] sm:$0xff]
        %v708 = vld [vmem:[#allocation9 + $0x10] sm:$0xff]
        %v709 = vld [vmem:[#allocation9 + $0x18] sm:$0xff]
        %v710 = vld [vmem:[#allocation9 + $0x20] sm:$0xff]
        %v711 = vld [vmem:[#allocation9 + $0x28] sm:$0xff]
        %v712 = vld [vmem:[#allocation9 + $0x30] sm:$0xff]
        %v713 = vld [vmem:[#allocation9 + $0x38] sm:$0xff]
        %v714 = vld [vmem:[#allocation9 + $0x40] sm:$0xff]
        %v715 = vld [vmem:[#allocation9 + $0x48] sm:$0xff]
        %v716 = vld [vmem:[#allocation9 + $0x50] sm:$0xff]
        %v717 = vld [vmem:[#allocation9 + $0x58] sm:$0xff]
        %v718 = vld [vmem:[#allocation9 + $0x60] sm:$0xff]
        %v719 = vld [vmem:[#allocation9 + $0x68] sm:$0xff]
        %v720 = vld [vmem:[#allocation9 + $0x70] sm:$0xff]
        %v721 = vld [vmem:[#allocation9 + $0x78] sm:$0xff]
        %v722 = vld [vmem:[#allocation9 + $0x80] sm:$0xff]
        %v723 = vld [vmem:[#allocation9 + $0x88] sm:$0xff]
        %v724 = vld [vmem:[#allocation9 + $0x90] sm:$0xff]
        %v725 = vld [vmem:[#allocation9 + $0x98] sm:$0xff]
        %v726 = vld [vmem:[#allocation9 + $0xa0] sm:$0xff]
        %v727 = vld [vmem:[#allocation9 + $0xa8] sm:$0xff]
        %v728 = vld [vmem:[#allocation9 + $0xb0] sm:$0xff]
        %v729 = vld [vmem:[#allocation9 + $0xb8] sm:$0xff]
        %v730 = vld [vmem:[#allocation9 + $0xc0] sm:$0xff]
        %v731 = vld [vmem:[#allocation9 + $0xc8] sm:$0xff]
        %v732 = vld [vmem:[#allocation9 + $0xd0] sm:$0xff]
        %v733 = vld [vmem:[#allocation9 + $0xd8] sm:$0xff]
        %v734 = vld [vmem:[#allocation9 + $0xe0] sm:$0xff]
        %v735 = vld [vmem:[#allocation9 + $0xe8] sm:$0xff]
        %v736 = vld [vmem:[#allocation9 + $0xf0] sm:$0xff]
        %v737 = vld [vmem:[#allocation9 + $0xf8] sm:$0xff]
        %v770 = vunpack.c.l.b16 %v706
        %v771 = vunpack.c.h.b16 %v706
        %v772 = vunpack.c.l.b16 %v707
        %v773 = vunpack.c.h.b16 %v707
        %v774 = vunpack.c.l.b16 %v708
        %v775 = vunpack.c.h.b16 %v708
        %v776 = vunpack.c.l.b16 %v709
        %v777 = vunpack.c.h.b16 %v709
        %v778 = vunpack.c.l.b16 %v710
        %v779 = vunpack.c.h.b16 %v710
        %v780 = vunpack.c.l.b16 %v711
        %v781 = vunpack.c.h.b16 %v711
        %v782 = vunpack.c.l.b16 %v712
        %v783 = vunpack.c.h.b16 %v712
        %v784 = vunpack.c.l.b16 %v713
        %v785 = vunpack.c.h.b16 %v713
        %v786 = vunpack.c.l.b16 %v714
        %v787 = vunpack.c.h.b16 %v714
        %v788 = vunpack.c.l.b16 %v715
        %v789 = vunpack.c.h.b16 %v715
        %v790 = vunpack.c.l.b16 %v716
        %v791 = vunpack.c.h.b16 %v716
        %v792 = vunpack.c.l.b16 %v717
        %v793 = vunpack.c.h.b16 %v717
        %v794 = vunpack.c.l.b16 %v718
        %v795 = vunpack.c.h.b16 %v718
        %v796 = vunpack.c.l.b16 %v719
        %v797 = vunpack.c.h.b16 %v719
        %v798 = vunpack.c.l.b16 %v720
        %v799 = vunpack.c.h.b16 %v720
        %v800 = vunpack.c.l.b16 %v721
        %v801 = vunpack.c.h.b16 %v721
        %v802 = vunpack.c.l.b16 %v722
        %v803 = vunpack.c.h.b16 %v722
        %v804 = vunpack.c.l.b16 %v723
        %v805 = vunpack.c.h.b16 %v723
        %v806 = vunpack.c.l.b16 %v724
        %v807 = vunpack.c.h.b16 %v724
        %v808 = vunpack.c.l.b16 %v725
        %v809 = vunpack.c.h.b16 %v725
        %v810 = vunpack.c.l.b16 %v726
        %v811 = vunpack.c.h.b16 %v726
        %v812 = vunpack.c.l.b16 %v727
        %v813 = vunpack.c.h.b16 %v727
        %v814 = vunpack.c.l.b16 %v728
        %v815 = vunpack.c.h.b16 %v728
        %v816 = vunpack.c.l.b16 %v729
        %v817 = vunpack.c.h.b16 %v729
        %v818 = vunpack.c.l.b16 %v730
        %v819 = vunpack.c.h.b16 %v730
        %v820 = vunpack.c.l.b16 %v731
        %v821 = vunpack.c.h.b16 %v731
        %v822 = vunpack.c.l.b16 %v732
        %v823 = vunpack.c.h.b16 %v732
        %v824 = vunpack.c.l.b16 %v733
        %v825 = vunpack.c.h.b16 %v733
        %v826 = vunpack.c.l.b16 %v734
        %v827 = vunpack.c.h.b16 %v734
        %v828 = vunpack.c.l.b16 %v735
        %v829 = vunpack.c.h.b16 %v735
        %v830 = vunpack.c.l.b16 %v736
        %v831 = vunpack.c.h.b16 %v736
        %v832 = vunpack.c.l.b16 %v737
        %v833 = vunpack.c.h.b16 %v737
        %v834 = vpack.c.b16 %v772, %v770
        %v835 = vpack.c.b16 %v773, %v771
        %v836 = vpack.c.b16 %v776, %v774
        %v837 = vpack.c.b16 %v777, %v775
        %v838 = vpack.c.b16 %v780, %v778
        %v839 = vpack.c.b16 %v781, %v779
        %v840 = vpack.c.b16 %v784, %v782
        %v841 = vpack.c.b16 %v785, %v783
        %v842 = vpack.c.b16 %v788, %v786
        %v843 = vpack.c.b16 %v789, %v787
        %v844 = vpack.c.b16 %v792, %v790
        %v845 = vpack.c.b16 %v793, %v791
        %v846 = vpack.c.b16 %v796, %v794
        %v847 = vpack.c.b16 %v797, %v795
        %v848 = vpack.c.b16 %v800, %v798
        %v849 = vpack.c.b16 %v801, %v799
        %v850 = vpack.c.b16 %v804, %v802
        %v851 = vpack.c.b16 %v805, %v803
        %v852 = vpack.c.b16 %v808, %v806
        %v853 = vpack.c.b16 %v809, %v807
        %v854 = vpack.c.b16 %v812, %v810
        %v855 = vpack.c.b16 %v813, %v811
        %v856 = vpack.c.b16 %v816, %v814
        %v857 = vpack.c.b16 %v817, %v815
        %v858 = vpack.c.b16 %v820, %v818
        %v859 = vpack.c.b16 %v821, %v819
        %v860 = vpack.c.b16 %v824, %v822
        %v861 = vpack.c.b16 %v825, %v823
        %v862 = vpack.c.b16 %v828, %v826
        %v863 = vpack.c.b16 %v829, %v827
        %v864 = vpack.c.b16 %v832, %v830
        %v865 = vpack.c.b16 %v833, %v831
        %898 = vmatprep.subr.bf16.mxu0 %v835
        %899 = vmatpush1.bf16.msra.mxu0 %v834
        %900 = vmatprep.subr.bf16.mxu0 %v837
        %901 = vmatpush1.bf16.msra.mxu0 %v836
        %902 = vmatprep.subr.bf16.mxu0 %v839
        %903 = vmatpush1.bf16.msra.mxu0 %v838
        %904 = vmatprep.subr.bf16.mxu0 %v841
        %905 = vmatpush1.bf16.msra.mxu0 %v840
        %906 = vmatprep.subr.bf16.mxu0 %v843
        %907 = vmatpush1.bf16.msra.mxu0 %v842
        %908 = vmatprep.subr.bf16.mxu0 %v845
        %909 = vmatpush1.bf16.msra.mxu0 %v844
        %910 = vmatprep.subr.bf16.mxu0 %v847
        %911 = vmatpush1.bf16.msra.mxu0 %v846
        %912 = vmatprep.subr.bf16.mxu0 %v849
        %913 = vmatpush1.bf16.msra.mxu0 %v848
        %914 = vmatprep.subr.bf16.mxu0 %v851
        %915 = vmatpush1.bf16.msra.mxu0 %v850
        %916 = vmatprep.subr.bf16.mxu0 %v853
        %917 = vmatpush1.bf16.msra.mxu0 %v852
        %918 = vmatprep.subr.bf16.mxu0 %v855
        %919 = vmatpush1.bf16.msra.mxu0 %v854
        %920 = vmatprep.subr.bf16.mxu0 %v857
        %921 = vmatpush1.bf16.msra.mxu0 %v856
        %922 = vmatprep.subr.bf16.mxu0 %v859
        %923 = vmatpush1.bf16.msra.mxu0 %v858
        %924 = vmatprep.subr.bf16.mxu0 %v861
        %925 = vmatpush1.bf16.msra.mxu0 %v860
        %926 = vmatprep.subr.bf16.mxu0 %v863
        %927 = vmatpush1.bf16.msra.mxu0 %v862
        %928 = vmatprep.subr.bf16.mxu0 %v865
        %929 = vmatpush1.bf16.msra.mxu0 %v864
        %930 = vmatprep.mubr.bf16.mxu0 %v699
        %931 = vmatmul.mubr.bf16.gmra.mrb[0].mxu0 %v698
        %v932 = vpop.f32.mrb[0].mxu0
        %v933 = vadd.f32 0.0, %v932
        %v934 = vpop.f32.mrb[0].mxu0
        %v935 = vadd.f32 0.0, %v934
        %v936 = vpop.f32.mrb[0].mxu0
        %v937 = vadd.f32 0.0, %v936
        %v938 = vpop.f32.mrb[0].mxu0
        %v939 = vadd.f32 0.0, %v938
        %940 = vmatprep.mubr.bf16.mxu0 %v701
        %941 = vmatmul.mubr.bf16.gmra.mrb[0].mxu0 %v700
        %v942 = vpop.f32.mrb[0].mxu0
        %v943 = vadd.f32 0.0, %v942
        %v944 = vpop.f32.mrb[0].mxu0
        %v945 = vadd.f32 0.0, %v944
        %v946 = vpop.f32.mrb[0].mxu0
        %v947 = vadd.f32 0.0, %v946
        %v948 = vpop.f32.mrb[0].mxu0
        %v949 = vadd.f32 0.0, %v948
        %950 = vmatprep.mubr.bf16.mxu0 %v703
        %951 = vmatmul.mubr.bf16.gmra.mrb[0].mxu0 %v702
        %v952 = vpop.f32.mrb[0].mxu0
        %v953 = vadd.f32 0.0, %v952
        %v954 = vpop.f32.mrb[0].mxu0
        %v955 = vadd.f32 0.0, %v954
        %v956 = vpop.f32.mrb[0].mxu0
        %v957 = vadd.f32 0.0, %v956
        %v958 = vpop.f32.mrb[0].mxu0
        %v959 = vadd.f32 0.0, %v958
        %960 = vmatprep.mubr.bf16.mxu0 %v705
        %961 = vmatmul.mubr.bf16.gmra.mrb[0].mxu0 %v704
        %v962 = vpop.f32.mrb[0].mxu0
        %v963 = vadd.f32 0.0, %v962
        %v964 = vpop.f32.mrb[0].mxu0
        %v965 = vadd.f32 0.0, %v964
        %v966 = vpop.f32.mrb[0].mxu0
        %v967 = vadd.f32 0.0, %v966
        %v968 = vpop.f32.mrb[0].mxu0
        %v969 = vadd.f32 0.0, %v968
        %970 = vdwg.mxu0
        %v971 = vmax.f32 %v933, 0.0
        %v972 = vmax.f32 %v935, 0.0
        %v973 = vmax.f32 %v937, 0.0
        %v974 = vmax.f32 %v939, 0.0
        %v975 = vmax.f32 %v943, 0.0
        %v976 = vmax.f32 %v945, 0.0
        %v977 = vmax.f32 %v947, 0.0
        %v978 = vmax.f32 %v949, 0.0
        %v979 = vmax.f32 %v953, 0.0
        %v980 = vmax.f32 %v955, 0.0
        %v981 = vmax.f32 %v957, 0.0
        %v982 = vmax.f32 %v959, 0.0
        %v983 = vmax.f32 %v963, 0.0
        %v984 = vmax.f32 %v965, 0.0
        %v985 = vmax.f32 %v967, 0.0
        %v986 = vmax.f32 %v969, 0.0
        %s987 = sadd.s32 %s223, 15838
        %s988 = smul.u32 %s987, 2654435769
        %v989 = vstv %s988
        %v990 = vadd.s32 %v471, %v989
        %v991 = vadd.s32 %v472, %v989
        %v992 = vadd.s32 %v473, %v989
        %v993 = vadd.s32 %v474, %v989
        %v994 = vadd.s32 %v475, %v989
        %v995 = vadd.s32 %v476, %v989
        %v996 = vadd.s32 %v477, %v989
        %v997 = vadd.s32 %v478, %v989
        %v998 = vadd.s32 %v479, %v989
        %v999 = vadd.s32 %v480, %v989
        %v1000 = vadd.s32 %v481, %v989
        %v1001 = vadd.s32 %v482, %v989
        %v1002 = vadd.s32 %v483, %v989
        %v1003 = vadd.s32 %v484, %v989
        %v1004 = vadd.s32 %v485, %v989
        %v1005 = vadd.s32 %v486, %v989
        %v1006 = vshrl.u32 %v990, 16
        %v1007 = vshrl.u32 %v991, 16
        %v1008 = vshrl.u32 %v992, 16
        %v1009 = vshrl.u32 %v993, 16
        %v1010 = vshrl.u32 %v994, 16
        %v1011 = vshrl.u32 %v995, 16
        %v1012 = vshrl.u32 %v996, 16
        %v1013 = vshrl.u32 %v997, 16
        %v1014 = vshrl.u32 %v998, 16
        %v1015 = vshrl.u32 %v999, 16
        %v1016 = vshrl.u32 %v1000, 16
        %v1017 = vshrl.u32 %v1001, 16
        %v1018 = vshrl.u32 %v1002, 16
        %v1019 = vshrl.u32 %v1003, 16
        %v1020 = vshrl.u32 %v1004, 16
        %v1021 = vshrl.u32 %v1005, 16
        %v1022 = vxor.u32 %v990, %v1006
        %v1023 = vxor.u32 %v991, %v1007
        %v1024 = vxor.u32 %v992, %v1008
        %v1025 = vxor.u32 %v993, %v1009
        %v1026 = vxor.u32 %v994, %v1010
        %v1027 = vxor.u32 %v995, %v1011
        %v1028 = vxor.u32 %v996, %v1012
        %v1029 = vxor.u32 %v997, %v1013
        %v1030 = vxor.u32 %v998, %v1014
        %v1031 = vxor.u32 %v999, %v1015
        %v1032 = vxor.u32 %v1000, %v1016
        %v1033 = vxor.u32 %v1001, %v1017
        %v1034 = vxor.u32 %v1002, %v1018
        %v1035 = vxor.u32 %v1003, %v1019
        %v1036 = vxor.u32 %v1004, %v1020
        %v1037 = vxor.u32 %v1005, %v1021
        %v1038 = vmul.u32 %v1022, 2146121005
        %v1039 = vmul.u32 %v1023, 2146121005
        %v1040 = vmul.u32 %v1024, 2146121005
        %v1041 = vmul.u32 %v1025, 2146121005
        %v1042 = vmul.u32 %v1026, 2146121005
        %v1043 = vmul.u32 %v1027, 2146121005
        %v1044 = vmul.u32 %v1028, 2146121005
        %v1045 = vmul.u32 %v1029, 2146121005
        %v1046 = vmul.u32 %v1030, 2146121005
        %v1047 = vmul.u32 %v1031, 2146121005
        %v1048 = vmul.u32 %v1032, 2146121005
        %v1049 = vmul.u32 %v1033, 2146121005
        %v1050 = vmul.u32 %v1034, 2146121005
        %v1051 = vmul.u32 %v1035, 2146121005
        %v1052 = vmul.u32 %v1036, 2146121005
        %v1053 = vmul.u32 %v1037, 2146121005
        %v1054 = vshrl.u32 %v1038, 15
        %v1055 = vshrl.u32 %v1039, 15
        %v1056 = vshrl.u32 %v1040, 15
        %v1057 = vshrl.u32 %v1041, 15
        %v1058 = vshrl.u32 %v1042, 15
        %v1059 = vshrl.u32 %v1043, 15
        %v1060 = vshrl.u32 %v1044, 15
        %v1061 = vshrl.u32 %v1045, 15
        %v1062 = vshrl.u32 %v1046, 15
        %v1063 = vshrl.u32 %v1047, 15
        %v1064 = vshrl.u32 %v1048, 15
        %v1065 = vshrl.u32 %v1049, 15
        %v1066 = vshrl.u32 %v1050, 15
        %v1067 = vshrl.u32 %v1051, 15
        %v1068 = vshrl.u32 %v1052, 15
        %v1069 = vshrl.u32 %v1053, 15
        %v1070 = vxor.u32 %v1038, %v1054
        %v1071 = vxor.u32 %v1039, %v1055
        %v1072 = vxor.u32 %v1040, %v1056
        %v1073 = vxor.u32 %v1041, %v1057
        %v1074 = vxor.u32 %v1042, %v1058
        %v1075 = vxor.u32 %v1043, %v1059
        %v1076 = vxor.u32 %v1044, %v1060
        %v1077 = vxor.u32 %v1045, %v1061
        %v1078 = vxor.u32 %v1046, %v1062
        %v1079 = vxor.u32 %v1047, %v1063
        %v1080 = vxor.u32 %v1048, %v1064
        %v1081 = vxor.u32 %v1049, %v1065
        %v1082 = vxor.u32 %v1050, %v1066
        %v1083 = vxor.u32 %v1051, %v1067
        %v1084 = vxor.u32 %v1052, %v1068
        %v1085 = vxor.u32 %v1053, %v1069
        %v1086 = vmul.u32 %v1070, 2221713035
        %v1087 = vmul.u32 %v1071, 2221713035
        %v1088 = vmul.u32 %v1072, 2221713035
        %v1089 = vmul.u32 %v1073, 2221713035
        %v1090 = vmul.u32 %v1074, 2221713035
        %v1091 = vmul.u32 %v1075, 2221713035
        %v1092 = vmul.u32 %v1076, 2221713035
        %v1093 = vmul.u32 %v1077, 2221713035
        %v1094 = vmul.u32 %v1078, 2221713035
        %v1095 = vmul.u32 %v1079, 2221713035
        %v1096 = vmul.u32 %v1080, 2221713035
        %v1097 = vmul.u32 %v1081, 2221713035
        %v1098 = vmul.u32 %v1082, 2221713035
        %v1099 = vmul.u32 %v1083, 2221713035
        %v1100 = vmul.u32 %v1084, 2221713035
        %v1101 = vmul.u32 %v1085, 2221713035
        %v1102 = vshrl.u32 %v1086, 16
        %v1103 = vshrl.u32 %v1087, 16
        %v1104 = vshrl.u32 %v1088, 16
        %v1105 = vshrl.u32 %v1089, 16
        %v1106 = vshrl.u32 %v1090, 16
        %v1107 = vshrl.u32 %v1091, 16
        %v1108 = vshrl.u32 %v1092, 16
        %v1109 = vshrl.u32 %v1093, 16
        %v1110 = vshrl.u32 %v1094, 16
        %v1111 = vshrl.u32 %v1095, 16
        %v1112 = vshrl.u32 %v1096, 16
        %v1113 = vshrl.u32 %v1097, 16
        %v1114 = vshrl.u32 %v1098, 16
        %v1115 = vshrl.u32 %v1099, 16
        %v1116 = vshrl.u32 %v1100, 16
        %v1117 = vshrl.u32 %v1101, 16
        %v1118 = vxor.u32 %v1086, %v1102
        %v1119 = vxor.u32 %v1087, %v1103
        %v1120 = vxor.u32 %v1088, %v1104
        %v1121 = vxor.u32 %v1089, %v1105
        %v1122 = vxor.u32 %v1090, %v1106
        %v1123 = vxor.u32 %v1091, %v1107
        %v1124 = vxor.u32 %v1092, %v1108
        %v1125 = vxor.u32 %v1093, %v1109
        %v1126 = vxor.u32 %v1094, %v1110
        %v1127 = vxor.u32 %v1095, %v1111
        %v1128 = vxor.u32 %v1096, %v1112
        %v1129 = vxor.u32 %v1097, %v1113
        %v1130 = vxor.u32 %v1098, %v1114
        %v1131 = vxor.u32 %v1099, %v1115
        %v1132 = vxor.u32 %v1100, %v1116
        %v1133 = vxor.u32 %v1101, %v1117
        %v1134 = vand.u32 %v1118, 2147483647
        %v1135 = vand.u32 %v1119, 2147483647
        %v1136 = vand.u32 %v1120, 2147483647
        %v1137 = vand.u32 %v1121, 2147483647
        %v1138 = vand.u32 %v1122, 2147483647
        %v1139 = vand.u32 %v1123, 2147483647
        %v1140 = vand.u32 %v1124, 2147483647
        %v1141 = vand.u32 %v1125, 2147483647
        %v1142 = vand.u32 %v1126, 2147483647
        %v1143 = vand.u32 %v1127, 2147483647
        %v1144 = vand.u32 %v1128, 2147483647
        %v1145 = vand.u32 %v1129, 2147483647
        %v1146 = vand.u32 %v1130, 2147483647
        %v1147 = vand.u32 %v1131, 2147483647
        %v1148 = vand.u32 %v1132, 2147483647
        %v1149 = vand.u32 %v1133, 2147483647
        %vm1150 = vcmp.ge.s32.totalorder %v1134, 1073741824
        %vm1151 = vcmp.ge.s32.totalorder %v1135, 1073741824
        %vm1152 = vcmp.ge.s32.totalorder %v1136, 1073741824
        %vm1153 = vcmp.ge.s32.totalorder %v1137, 1073741824
        %vm1154 = vcmp.ge.s32.totalorder %v1138, 1073741824
        %vm1155 = vcmp.ge.s32.totalorder %v1139, 1073741824
        %vm1156 = vcmp.ge.s32.totalorder %v1140, 1073741824
        %vm1157 = vcmp.ge.s32.totalorder %v1141, 1073741824
        %vm1158 = vcmp.ge.s32.totalorder %v1142, 1073741824
        %vm1159 = vcmp.ge.s32.totalorder %v1143, 1073741824
        %vm1160 = vcmp.ge.s32.totalorder %v1144, 1073741824
        %vm1161 = vcmp.ge.s32.totalorder %v1145, 1073741824
        %vm1162 = vcmp.ge.s32.totalorder %v1146, 1073741824
        %vm1163 = vcmp.ge.s32.totalorder %v1147, 1073741824
        %vm1164 = vcmp.ge.s32.totalorder %v1148, 1073741824
        %vm1165 = vcmp.ge.s32.totalorder %v1149, 1073741824
        %v1166 = vmul.f32 %v971, 2.0
        %v1167 = vmul.f32 %v972, 2.0
        %v1168 = vmul.f32 %v973, 2.0
        %v1169 = vmul.f32 %v974, 2.0
        %v1170 = vmul.f32 %v975, 2.0
        %v1171 = vmul.f32 %v976, 2.0
        %v1172 = vmul.f32 %v977, 2.0
        %v1173 = vmul.f32 %v978, 2.0
        %v1174 = vmul.f32 %v979, 2.0
        %v1175 = vmul.f32 %v980, 2.0
        %v1176 = vmul.f32 %v981, 2.0
        %v1177 = vmul.f32 %v982, 2.0
        %v1178 = vmul.f32 %v983, 2.0
        %v1179 = vmul.f32 %v984, 2.0
        %v1180 = vmul.f32 %v985, 2.0
        %v1181 = vmul.f32 %v986, 2.0
        %v1182 = vsel %vm1150, %v1166, 0.0
        %v1183 = vsel %vm1151, %v1167, 0.0
        %v1184 = vsel %vm1152, %v1168, 0.0
        %v1185 = vsel %vm1153, %v1169, 0.0
        %v1186 = vsel %vm1154, %v1170, 0.0
        %v1187 = vsel %vm1155, %v1171, 0.0
        %v1188 = vsel %vm1156, %v1172, 0.0
        %v1189 = vsel %vm1157, %v1173, 0.0
        %v1190 = vsel %vm1158, %v1174, 0.0
        %v1191 = vsel %vm1159, %v1175, 0.0
        %v1192 = vsel %vm1160, %v1176, 0.0
        %v1193 = vsel %vm1161, %v1177, 0.0
        %v1194 = vsel %vm1162, %v1178, 0.0
        %v1195 = vsel %vm1163, %v1179, 0.0
        %v1196 = vsel %vm1164, %v1180, 0.0
        %v1197 = vsel %vm1165, %v1181, 0.0
        %1198 = vst [vmem:[%s219] sm:$0xff] %v1182
        %1199 = vst [vmem:[%s219 + $0x8] sm:$0xff] %v1183
        %1200 = vst [vmem:[%s219 + $0x10] sm:$0xff] %v1184
        %1201 = vst [vmem:[%s219 + $0x18] sm:$0xff] %v1185
        %1202 = vst [vmem:[%s219 + $0x20] sm:$0xff] %v1186
        %1203 = vst [vmem:[%s219 + $0x28] sm:$0xff] %v1187
        %1204 = vst [vmem:[%s219 + $0x30] sm:$0xff] %v1188
        %1205 = vst [vmem:[%s219 + $0x38] sm:$0xff] %v1189
        %1206 = vst [vmem:[%s219 + $0x40] sm:$0xff] %v1190
        %1207 = vst [vmem:[%s219 + $0x48] sm:$0xff] %v1191
        %1208 = vst [vmem:[%s219 + $0x50] sm:$0xff] %v1192
        %1209 = vst [vmem:[%s219 + $0x58] sm:$0xff] %v1193
        %1210 = vst [vmem:[%s219 + $0x60] sm:$0xff] %v1194
        %1211 = vst [vmem:[%s219 + $0x68] sm:$0xff] %v1195
        %1212 = vst [vmem:[%s219 + $0x70] sm:$0xff] %v1196
        %1213 = vst [vmem:[%s219 + $0x78] sm:$0xff] %v1197
        %s1214 = sand.u32 %s99, 1
        %s1215 = scalar_lea.sflag [#allocation6], %s1214
        %s1216 = sand.u32 %s99, 1
        %s1217 = smul.addr %s1216, 128
        %s1218 = scalar_lea.vmem [#allocation10], %s1217
        // Predicated region
        $region45: #{tpu_custom_call.1} parent=31 // pred_check
          %p1219 = pneg %p109
        $region46: #{tpu_custom_call.1} parent=31 // pred_check_branch
          %1221 = sbr.rel (%p1219) target = $region48
        $region47: #{tpu_custom_call.1} parent=31 // pred_region
          %s1222 = smul.u32 8, %s23
          %s1224 = ssub.s32 2048, 2048
          %1225 = vsyncadd %s1215, %s1224
          %s1226 = smul.addr %s1222, 2
          %s1227 = smul.addr %s1226, 128
          %s1228 = scalar_lea.hbm %s4, %s1227
          %s1229 = sshll.u32 %s1218, 4
          %s1230 = int_to_ptr.vmem [resolvable:$true] %s1229
          %1235 = dma.vmem_to_hbm [thread:$0]  %s1230, 2048, %s1228, %s1215, 256, 256, 16
        $region48: #{tpu_custom_call.1} parent=31 // pred_fallthru
          _
      $region32: #{tpu_custom_call.1} parent=5 // pred_fallthru
        _
      %p1236 = scmp.le.s32.totalorder 2, %s18
      // Predicated region
      $region49: #{tpu_custom_call.1} parent=5 // pred_check
        %p1237 = pneg %p1236
      $region50: #{tpu_custom_call.1} parent=5 // pred_check_branch
        %1239 = sbr.rel (%p1237) target = $region52
      $region51: #{tpu_custom_call.1} parent=5 // pred_region
        %s1240 = ssub.s32 %s18, 2
        // Predicated region
        $region53: #{tpu_custom_call.1} parent=51 // pred_check
          %p1241 = pneg %p115
        $region54: #{tpu_custom_call.1} parent=51 // pred_check_branch
          %1243 = sbr.rel (%p1241) target = $region56
        $region55: #{tpu_custom_call.1} parent=51 // pred_region
          %s1244 = sand.u32 %s100, 1
          %s1245 = scalar_lea.sflag [#allocation6], %s1244
          %s1246 = sand.u32 %s100, 1
          %s1247 = smul.addr %s1246, 128
          %s1248 = scalar_lea.vmem [#allocation10], %s1247
          %1249 = dma.done %s1245, 2048
        $region56: #{tpu_custom_call.1} parent=51 // pred_fallthru
          _
      $region52: #{tpu_custom_call.1} parent=5 // pred_fallthru
        _
    $region6: #{tpu_custom_call.1} parent=1 // loop_footer
      %s22 = sadd.s32 1, %s18
    $region7: #{tpu_custom_call.1} parent=1 // loop_footer_branch
      %17 = sbr.rel target = $region3
    $region8: #{tpu_custom_call.1} parent=1 // loop_exit
      _
    %1250 = vsyncpa [#allocation5], 1
    %s1251 = scalar_lea.sflag [#allocation5], 1
    %1252 = vsyncpa %s1251, 1
    %1253 = vsyncpa [#allocation8], 1
    %1254 = vsyncpa [#allocation6], 1
    %s1255 = scalar_lea.sflag [#allocation6], 1
    %1256 = vsyncpa %s1255, 1

</llo_original>
